<compile_context>
chip_gen: v6e
topology: v6e:2x2x1
jax: 0.10.0
libtpu: 0.0.40
codegen_flags: <defaults>
</compile_context>

<pallas_src>
import jax
import jax.numpy as jnp
from jax.experimental import pallas as pl
from jax.experimental.pallas import tpu as pltpu


def _round_up(x, m):
    return (x + m - 1) // m * m


def _vmem_limit_bytes():
    # v5e/v6e: 128 MiB physical VMEM; v7x: 64 MiB. Leave ~50% headroom below physical.
    try:
        cap = int(pltpu.get_tpu_info().vmem_capacity_bytes)
    except Exception:
        cap = 128 * 1024 * 1024
    return min(64 * 1024 * 1024, cap // 2)


def _default_batch_tile(B, S, H, H2, vmem_limit_bytes):
    # Generation-aware default:
    #  * v5e/v6e (1 TensorCore): tb=B -> single grid step, no ~0.35us/step overhead.
    #  * v7x (2 TensorCores): keep >=4 grid steps so dimension_semantics=("parallel",)
    #    can shard steps across cores and double-buffering overlaps HBM streaming.
    num_tc = 1
    try:
        if "v7" in jax.devices()[0].device_kind.lower():
            num_tc = 2
    except Exception:
        pass

    tb = B
    if num_tc > 1 and B >= 16 * num_tc:
        tb = max(8, B // (2 * num_tc))

    # VMEM budget: ~2x (double-buffered) streamed inputs + packed output per step,
    # with ~25% headroom inside the scoped limit.
    def step_bytes(t):
        streamed = 4 * t * (S * (H + H2) + H + 1)           # proj_key + value + query + len
        out = 4 * t * _round_up(H2 + S, 128)
        weights = 4 * (H * H + H)
        return 2 * (streamed + out) + weights

    budget = int(0.75 * vmem_limit_bytes)
    while tb > 8 and step_bytes(tb) > budget:
        tb //= 2

    if tb != B:
        # Keep tiles sublane-friendly: a multiple of 8 that divides B (else fall back to B).
        tb = max(8, (tb // 8) * 8)
        while tb >= 8 and B % tb:
            tb -= 8
        if tb < 8:
            tb = B
    return tb


def bahdanau_attn_kernel(len_ref, q_ref, pk_ref, v_ref, wqt_ref, we_ref, out_ref):
    q = q_ref[...]                      # (TB, H)
    pk = pk_ref[...]                    # (TB, S, H)
    we = we_ref[...]                    # (1, H)
    lens = len_ref[...]                 # (TB, 1) int32

    TB, H = q.shape
    S = pk.shape[1]
    H2 = v_ref.shape[2]

    # query = query_layer(query): one batched MXU call for the whole tile.
    # wqt is pre-transposed (in, out) so no per-step XLU transpose of the weight.
    q_proj = jax.lax.dot_general(q, wqt_ref[...], (((1,), (0,)), ((), ())),
                                 preferred_element_type=jnp.float32)     # (TB, H)

    # tanh(query + proj_key): VPU add + EUP tanh, kept in f32 (v5e has no bf16
    # VPU/EUP and the 1e-5 tolerance must hold).
    t = jnp.tanh(q_proj[:, None, :] + pk)                                # (TB, S, H)

    # energy_layer(...): output width 1 -> skip the MXU; VPU multiply + lane
    # reduce over H (XLU slot).
    scores = jnp.sum(t * we, axis=-1)                                    # (TB, S)

    # Padding mask rebuilt in-kernel from per-row lengths (iota+cmp is free VPU
    # filler), replacing the (B, S) int32 mask HBM stream.
    # (Rows with length 0 give all -inf scores -> NaN alphas, matching PyTorch.)
    pos = jax.lax.broadcasted_iota(jnp.int32, (TB, S), 1)
    scores = jnp.where(pos < lens, scores, jnp.float32(-jnp.inf))

    # softmax over the sequence axis (f32, exact reciprocal for 1e-5 tolerance).
    s_max = jnp.max(scores, axis=-1, keepdims=True)
    e = jnp.exp(scores - s_max)
    denom = jnp.sum(e, axis=-1, keepdims=True)
    alphas = e * pl.reciprocal(denom, approx=False)                      # (TB, S)

    # context = alphas @ value as a weighted sum + sublane reduce (avoids TB
    # separate M=1 MXU calls). For large S per tile, accumulate in chunks so the
    # (TB, chunk, H2) f32 temporary stays small (keeps big tiles under v7x VMEM).
    if S > 512:
        ctx = jnp.zeros((TB, H2), jnp.float32)
        step = 256
        for c in range(0, S, step):
            ctx = ctx + jnp.sum(alphas[:, c:c + step, None] * v_ref[:, c:c + step, :],
                                axis=1)
    else:
        ctx = jnp.sum(alphas[:, :, None] * v_ref[...], axis=1)           # (TB, H2)

    # Lane-dense writeback: pack [context | alphas | zero pad] into one
    # 128-multiple-wide slab -> a single unmasked vst instead of two masked stores.
    pad = out_ref.shape[1] - (H2 + S)
    parts = [ctx.astype(out_ref.dtype), alphas.astype(out_ref.dtype)]
    if pad:
        parts.append(jnp.zeros((TB, pad), out_ref.dtype))
    out_ref[...] = jnp.concatenate(parts, axis=-1)


def bahdanau_attention(mask, query, proj_key, value, wq, we, *, lengths=None, tb=None):
    B, _, H = query.shape
    S = proj_key.shape[1]
    H2 = value.shape[2]
    PACKW = _round_up(H2 + S, 128)

    if lengths is None:
        # The encoder padding mask is a contiguous prefix of valid tokens, so it is fully
        # described by per-row lengths; deriving them here keeps forward(mask, ...) semantics
        # while letting the kernel drop the (B, S) mask stream entirely.
        # TODO(synk): non-prefix masks would need the full mask streamed into the kernel.
        lengths = jnp.sum((mask != 0).astype(jnp.int32), axis=-1)        # (B, 1)
    lengths = jnp.asarray(lengths, jnp.int32).reshape(B, 1)

    vmem_limit = _vmem_limit_bytes()
    if tb is None:
        tb = _default_batch_tile(B, S, H, H2, vmem_limit)
    assert B % tb == 0 and (tb == B or tb % 8 == 0), "bad batch tile"

    q2d = query.reshape(B, H)            # squeeze degenerate middle dim
    wq_t = jnp.transpose(wq)             # (in, out): weight is constant, transpose is free

    grid_spec = pltpu.PrefetchScalarGridSpec(
        num_scalar_prefetch=0,
        grid=(B // tb,),
        in_specs=[
            pl.BlockSpec((tb, 1), lambda b: (b, 0)),          # lengths
            pl.BlockSpec((tb, H), lambda b: (b, 0)),          # query (2D)
            pl.BlockSpec((tb, S, H), lambda b: (b, 0, 0)),    # proj_key
            pl.BlockSpec((tb, S, H2), lambda b: (b, 0, 0)),   # value
            pl.BlockSpec((H, H), lambda b: (0, 0)),           # W_query^T (in, out)
            pl.BlockSpec((1, H), lambda b: (0, 0)),           # W_energy
        ],
        out_specs=pl.BlockSpec((tb, PACKW), lambda b: (b, 0)),  # packed [ctx | alphas | pad]
    )

    # Advisory cost so XLA schedules the surrounding graph sensibly.
    flops = 2 * B * H * H + 3 * B * S * H + 5 * B * S + 2 * B * S * H2
    transcendentals = B * S * H + B * S
    bytes_accessed = 4 * (B + B * H + B * S * H + B * S * H2 + H * H + H + B * PACKW)
    cost = pl.CostEstimate(flops=flops, transcendentals=transcendentals,
                           bytes_accessed=bytes_accessed)

    packed = pl.pallas_call(
        bahdanau_attn_kernel,
        out_shape=jax.ShapeDtypeStruct((B, PACKW), jnp.float32),
        grid_spec=grid_spec,
        cost_estimate=cost,
        compiler_params=pltpu.CompilerParams(
            dimension_semantics=("parallel",),
            vmem_limit_bytes=vmem_limit),
    )(lengths, q2d, proj_key, value, wq_t, we)

    context = packed[:, :H2].reshape(B, 1, H2)
    alphas = packed[:, H2:H2 + S].reshape(B, 1, S)
    return context, alphas


def reference(mask, query, proj_key, value, wq, we):
    q = jnp.einsum("bqh,oh->bqo", query, wq)                  # query_layer
    t = jnp.tanh(q + proj_key)                                # (B, S, H)
    scores = jnp.einsum("bsh,oh->bso", t, we)                 # (B, S, 1)
    scores = jnp.transpose(scores, (0, 2, 1))                 # (B, 1, S)
    scores = jnp.where(mask == 0, -jnp.inf, scores)
    alphas = jax.nn.softmax(scores, axis=-1)
    context = jnp.einsum("bqs,bsd->bqd", alphas, value)
    return context, alphas


if __name__ == "__main__":
    # Sizes implied by the module: hidden=32, sequence_length=9 -> S = 8, batch=2
    B, H, S = 2, 32, 8
    H2 = 2 * H

    key = jax.random.PRNGKey(0)
    k_q, k_pk, k_v, k_wq, k_we = jax.random.split(key, 5)

    query = jax.random.normal(k_q, (B, 1, H), dtype=jnp.float32)
    proj_key = jax.random.normal(k_pk, (B, S, H), dtype=jnp.float32)
    value = jax.random.normal(k_v, (B, S, H2), dtype=jnp.float32)

    # Deterministic parameter init (nn.Linear weight shapes: (out, in), no bias).
    wq = jax.random.normal(k_wq, (H, H), dtype=jnp.float32) * (1.0 / jnp.sqrt(H))
    we = jax.random.normal(k_we, (1, H), dtype=jnp.float32) * (1.0 / jnp.sqrt(H))
    # key_layer exists in __init__ but is unused in forward (proj_key is pre-projected).

    # Padding mask: batch 0 has all 8 valid tokens, batch 1 has 5 valid tokens.
    lengths = jnp.array([8, 5], dtype=jnp.int32)
    mask = (jnp.arange(S)[None, None, :] < lengths[:, None, None]).astype(jnp.int32)

    context, alphas = bahdanau_attention(mask, query, proj_key, value, wq, we,
                                         lengths=lengths)
    jax.block_until_ready((context, alphas))

    ref_ctx, ref_alphas = reference(mask, query, proj_key, value, wq, we)
    assert context.shape == (B, 1, H2)
    assert alphas.shape == (B, 1, S)
    assert jnp.allclose(context, ref_ctx, atol=1e-5, rtol=1e-5)
    assert jnp.allclose(alphas, ref_alphas, atol=1e-5, rtol=1e-5)

    print("KERNEL_OK")
</pallas_src>

<mosaic_0001>
module attributes {stable_mosaic.version = 11 : i64} {
  func.func @bahdanau_attn_kernel(%arg0: i32, %arg1: memref<2x1xi32, #tpu.memory_space<vmem>>, %arg2: memref<2x32xf32, #tpu.memory_space<vmem>>, %arg3: memref<2x8x32xf32, #tpu.memory_space<vmem>>, %arg4: memref<2x8x64xf32, #tpu.memory_space<vmem>>, %arg5: memref<32x32xf32, #tpu.memory_space<vmem>>, %arg6: memref<1x32xf32, #tpu.memory_space<vmem>>, %arg7: memref<2x128xf32, #tpu.memory_space<vmem>>) attributes {dimension_semantics = [#tpu.dimension_semantics<parallel>], iteration_bounds = array<i64: 1>, scalar_prefetch = 0 : i64, scratch_operands = 0 : i64, tpu.core_type = #tpu.core_type<tc>, window_params = [{transform_indices = @transform_0, window_bounds = array<i64: 2, 1>}, {transform_indices = @transform_1, window_bounds = array<i64: 2, 32>}, {transform_indices = @transform_2, window_bounds = array<i64: 2, 8, 32>}, {transform_indices = @transform_3, window_bounds = array<i64: 2, 8, 64>}, {pipeline_mode = #tpu.pipeline_mode<synchronous>, transform_indices = @transform_4, window_bounds = array<i64: 32, 32>}, {pipeline_mode = #tpu.pipeline_mode<synchronous>, transform_indices = @transform_5, window_bounds = array<i64: 1, 32>}, {transform_indices = @transform_6, window_bounds = array<i64: 2, 128>}]} {
    %c0 = arith.constant 0 : index
    %c0_0 = arith.constant 0 : index
    %0 = vector.load %arg2[%c0, %c0_0] : memref<2x32xf32, #tpu.memory_space<vmem>>, vector<2x32xf32>
    %c0_1 = arith.constant 0 : index
    %c0_2 = arith.constant 0 : index
    %c0_3 = arith.constant 0 : index
    %1 = vector.load %arg3[%c0_1, %c0_2, %c0_3] : memref<2x8x32xf32, #tpu.memory_space<vmem>>, vector<2x8x32xf32>
    %c0_4 = arith.constant 0 : index
    %c0_5 = arith.constant 0 : index
    %2 = vector.load %arg6[%c0_4, %c0_5] : memref<1x32xf32, #tpu.memory_space<vmem>>, vector<1x32xf32>
    %c0_6 = arith.constant 0 : index
    %c0_7 = arith.constant 0 : index
    %3 = vector.load %arg1[%c0_6, %c0_7] : memref<2x1xi32, #tpu.memory_space<vmem>>, vector<2x1xi32>
    %c0_8 = arith.constant 0 : index
    %c0_9 = arith.constant 0 : index
    %4 = vector.load %arg5[%c0_8, %c0_9] : memref<32x32xf32, #tpu.memory_space<vmem>>, vector<32x32xf32>
    %cst = arith.constant dense<0.000000e+00> : vector<2x32xf32>
    %5 = tpu.matmul %0, %4, %cst {dimension_numbers = #tpu.dot_dimension_numbers<[1], [0], [0], [1], [0, 0, 1, 1], [], []>} : vector<2x32xf32>, vector<32x32xf32>, vector<2x32xf32> -> vector<2x32xf32>
    %6 = vector.shape_cast %5 : vector<2x32xf32> to vector<2x1x32xf32>
    %7 = vector.broadcast %6 : vector<2x1x32xf32> to vector<2x8x32xf32>
    %8 = arith.addf %7, %1 : vector<2x8x32xf32>
    %9 = math.tanh %8 : vector<2x8x32xf32>
    %10 = vector.shape_cast %2 : vector<1x32xf32> to vector<1x1x32xf32>
    %11 = vector.broadcast %10 : vector<1x1x32xf32> to vector<2x8x32xf32>
    %12 = arith.mulf %9, %11 : vector<2x8x32xf32>
    %cst_10 = arith.constant dense<0.000000e+00> : vector<2x8xf32>
    %13 = vector.multi_reduction <add>, %12, %cst_10 [2] : vector<2x8x32xf32> to vector<2x8xf32>
    %14 = tpu.iota {dimensions = array<i32: 1>} : vector<2x8xi32>
    %15 = vector.broadcast %3 : vector<2x1xi32> to vector<2x8xi32>
    %16 = arith.cmpi slt, %14, %15 : vector<2x8xi32>
    %cst_11 = arith.constant 0xFF800000 : f32
    %17 = vector.broadcast %cst_11 : f32 to vector<2x8xf32>
    %18 = arith.select %16, %13, %17 : vector<2x8xi1>, vector<2x8xf32>
    %cst_12 = arith.constant dense<0xFF800000> : vector<2xf32>
    %19 = vector.multi_reduction <maximumf>, %18, %cst_12 [1] : vector<2x8xf32> to vector<2xf32>
    %20 = vector.shape_cast %19 : vector<2xf32> to vector<2x1xf32>
    %21 = vector.broadcast %20 : vector<2x1xf32> to vector<2x8xf32>
    %22 = arith.subf %18, %21 : vector<2x8xf32>
    %23 = math.exp %22 : vector<2x8xf32>
    %cst_13 = arith.constant dense<0.000000e+00> : vector<2xf32>
    %24 = vector.multi_reduction <add>, %23, %cst_13 [1] : vector<2x8xf32> to vector<2xf32>
    %25 = vector.shape_cast %24 : vector<2xf32> to vector<2x1xf32>
    %26 = tpu.reciprocal %25 : vector<2x1xf32> -> vector<2x1xf32>
    %27 = vector.broadcast %26 : vector<2x1xf32> to vector<2x8xf32>
    %28 = arith.mulf %23, %27 : vector<2x8xf32>
    %29 = vector.shape_cast %28 : vector<2x8xf32> to vector<2x8x1xf32>
    %c0_14 = arith.constant 0 : index
    %c0_15 = arith.constant 0 : index
    %c0_16 = arith.constant 0 : index
    %30 = vector.load %arg4[%c0_14, %c0_15, %c0_16] : memref<2x8x64xf32, #tpu.memory_space<vmem>>, vector<2x8x64xf32>
    %31 = vector.broadcast %29 : vector<2x8x1xf32> to vector<2x8x64xf32>
    %32 = arith.mulf %31, %30 : vector<2x8x64xf32>
    %cst_17 = arith.constant dense<0.000000e+00> : vector<2x64xf32>
    %33 = vector.multi_reduction <add>, %32, %cst_17 [1] : vector<2x8x64xf32> to vector<2x64xf32>
    %cst_18 = arith.constant 0.000000e+00 : f32
    %34 = vector.broadcast %cst_18 : f32 to vector<2x56xf32>
    %35 = tpu.concatenate %33, %28, %34 in 1 : vector<2x64xf32>, vector<2x8xf32>, vector<2x56xf32> -> vector<2x128xf32>
    %c0_19 = arith.constant 0 : index
    %c0_20 = arith.constant 0 : index
    %36 = vector.load %arg7[%c0_19, %c0_20] : memref<2x128xf32, #tpu.memory_space<vmem>>, vector<2x128xf32>
    tpu.vector_store %arg7[%c0_19, %c0_20], %35 {strides = array<i32>} : memref<2x128xf32, #tpu.memory_space<vmem>>, vector<2x128xf32>,
    return
  }
  func.func @transform_0(%arg0: i32) -> (i32, i32) {
    %c0_i32 = arith.constant 0 : i32
    %c0_i32_0 = arith.constant 0 : i32
    return %arg0, %c0_i32 : i32, i32
  }
  func.func @transform_1(%arg0: i32) -> (i32, i32) {
    %c0_i32 = arith.constant 0 : i32
    %c0_i32_0 = arith.constant 0 : i32
    return %arg0, %c0_i32 : i32, i32
  }
  func.func @transform_2(%arg0: i32) -> (i32, i32, i32) {
    %c0_i32 = arith.constant 0 : i32
    %c0_i32_0 = arith.constant 0 : i32
    %c0_i32_1 = arith.constant 0 : i32
    return %arg0, %c0_i32, %c0_i32_0 : i32, i32, i32
  }
  func.func @transform_3(%arg0: i32) -> (i32, i32, i32) {
    %c0_i32 = arith.constant 0 : i32
    %c0_i32_0 = arith.constant 0 : i32
    %c0_i32_1 = arith.constant 0 : i32
    return %arg0, %c0_i32, %c0_i32_0 : i32, i32, i32
  }
  func.func @transform_4(%arg0: i32) -> (i32, i32) {
    %c0_i32 = arith.constant 0 : i32
    %c0_i32_0 = arith.constant 0 : i32
    %c0_i32_1 = arith.constant 0 : i32
    return %c0_i32, %c0_i32_0 : i32, i32
  }
  func.func @transform_5(%arg0: i32) -> (i32, i32) {
    %c0_i32 = arith.constant 0 : i32
    %c0_i32_0 = arith.constant 0 : i32
    %c0_i32_1 = arith.constant 0 : i32
    return %c0_i32, %c0_i32_0 : i32, i32
  }
  func.func @transform_6(%arg0: i32) -> (i32, i32) {
    %c0_i32 = arith.constant 0 : i32
    %c0_i32_0 = arith.constant 0 : i32
    return %arg0, %c0_i32 : i32, i32
  }
}

</mosaic_0001>

<llo_original>
// kernel: tpu_custom_call.1
$region0: #{tpu_custom_call.1}
  #allocation0 [shape = 'u32[]', space=smem, size = 0x4, offset = 0x4, fixed_abs, tag = 'smem constant byte address 0x4 - core index']
  #allocation1 [shape = 'u32[144,128]{1,0:T(1,128)}', space=vmem, size = 0x12000, scoped, tag = 'internal scratch']
  %s0 = inlined_call_operand.vmem [shape: s32[2,1], index: 0, kind: input, shape index: {}]
  %s1 = inlined_call_operand.vmem [shape: f32[2,32], index: 1, kind: input, shape index: {}]
  %s2 = inlined_call_operand.hbm [shape: f32[2,8,32], index: 2, kind: input, shape index: {}]
  %s3 = inlined_call_operand.hbm [shape: f32[2,8,64], index: 3, kind: input, shape index: {}]
  %s4 = inlined_call_operand.hbm [shape: f32[32,32], index: 4, kind: input, shape index: {}]
  %s5 = inlined_call_operand.vmem [shape: f32[1,32], index: 5, kind: input, shape index: {}]
  %s6 = inlined_call_operand.hbm [shape: f32[2,128], index: 6, kind: output, shape index: {}]
  %s7 = sld [smem:[#allocation0]]
  $region46: #{tpu_custom_call.1} parent=0
    _
  %s9 = ssub.s32 1, %s7
  %s10 = scalar_select 0, %s9, %s7
  $region1: #{tpu_custom_call.1} parent=0
    #allocation2 [shape = 'u8[8192]{0}', space=vmem, size = 0x2000, scoped, tag = 'input window, operand 2, single buffered']
    #allocation3 [shape = 's32[1]{0}', space=sflag, size = 0x4, scoped, tag = 'scoped memory for tpu_custom_call.1']
    #allocation4 [shape = 's32[1]{0}', space=sflag, size = 0x4, scoped, tag = 'scoped memory for tpu_custom_call.1']
    #allocation5 [shape = 'u8[8192]{0}', space=vmem, size = 0x2000, scoped, tag = 'input window, operand 3, single buffered']
    #allocation6 [shape = 's32[1]{0}', space=sflag, size = 0x4, scoped, tag = 'scoped memory for tpu_custom_call.1']
    #allocation7 [shape = 'u8[16384]{0}', space=vmem, size = 0x4000, scoped, tag = 'input window, operand 4, single buffered']
    #allocation8 [shape = 'u8[1024]{0}', space=vmem, size = 0x400, scoped, tag = 'output window, operand 0, single buffered']
    %11 = vsyncpa [#allocation3], 0
    %12 = vsyncpa [#allocation6], 0
    %13 = vsyncpa [#allocation4], 0
    // Predicated region
    $region2: #{tpu_custom_call.1} parent=1 // pred_check
      _
    $region3: #{tpu_custom_call.1} parent=1 // pred_check_branch
      %15 = sbr.rel (0) target = $region5
    $region4: #{tpu_custom_call.1} parent=1 // pred_region
      _
    $region5: #{tpu_custom_call.1} parent=1 // pred_fallthru
      _
    // Predicated region
    $region6: #{tpu_custom_call.1} parent=1 // pred_check
      _
    $region7: #{tpu_custom_call.1} parent=1 // pred_check_branch
      %17 = sbr.rel (0) target = $region9
    $region8: #{tpu_custom_call.1} parent=1 // pred_region
      _
    $region9: #{tpu_custom_call.1} parent=1 // pred_fallthru
      _
    // Predicated region
    $region10: #{tpu_custom_call.1} parent=1 // pred_check
      _
    $region11: #{tpu_custom_call.1} parent=1 // pred_check_branch
      %19 = sbr.rel (0) target = $region13
    $region12: #{tpu_custom_call.1} parent=1 // pred_region
      %s21 = ssub.s32 256, 256
      %22 = vsyncadd [#allocation3], %s21
      %s23 = sshll.u32 [#allocation2], 4
      %s24 = int_to_ptr.vmem [resolvable:$true] %s23
      %29 = dma.hbm_to_vmem [thread:$0]  %s2, 256, %s24, [#allocation3], 128, 128, 8
    $region13: #{tpu_custom_call.1} parent=1 // pred_fallthru
      _
    // Predicated region
    $region14: #{tpu_custom_call.1} parent=1 // pred_check
      _
    $region15: #{tpu_custom_call.1} parent=1 // pred_check_branch
      %31 = sbr.rel (0) target = $region17
    $region16: #{tpu_custom_call.1} parent=1 // pred_region
      %s33 = ssub.s32 256, 256
      %34 = vsyncadd [#allocation6], %s33
      %s35 = sshll.u32 [#allocation5], 4
      %s36 = int_to_ptr.vmem [resolvable:$true] %s35
      %41 = dma.hbm_to_vmem [thread:$0]  %s3, 256, %s36, [#allocation6], 128, 128, 8
    $region17: #{tpu_custom_call.1} parent=1 // pred_fallthru
      _
    // Predicated region
    $region18: #{tpu_custom_call.1} parent=1 // pred_check
      _
    $region19: #{tpu_custom_call.1} parent=1 // pred_check_branch
      %43 = sbr.rel (0) target = $region21
    $region20: #{tpu_custom_call.1} parent=1 // pred_region
      %s45 = ssub.s32 512, 512
      %46 = vsyncadd [#allocation6], %s45
      %s47 = sshll.u32 [#allocation7], 4
      %s48 = int_to_ptr.vmem [resolvable:$true] %s47
      %53 = dma.hbm_to_vmem [thread:$0]  %s4, 512, %s48, [#allocation6], 128, 128, 8
    $region21: #{tpu_custom_call.1} parent=1 // pred_fallthru
      _
    // Predicated region
    $region22: #{tpu_custom_call.1} parent=1 // pred_check
      _
    $region23: #{tpu_custom_call.1} parent=1 // pred_check_branch
      %55 = sbr.rel (0) target = $region25
    $region24: #{tpu_custom_call.1} parent=1 // pred_region
      _
    $region25: #{tpu_custom_call.1} parent=1 // pred_fallthru
      _
    // Predicated region
    $region26: #{tpu_custom_call.1} parent=1 // pred_check
      _
    $region27: #{tpu_custom_call.1} parent=1 // pred_check_branch
      %57 = sbr.rel (0) target = $region29
    $region28: #{tpu_custom_call.1} parent=1 // pred_region
      %58 = dma.done [#allocation3], 256
    $region29: #{tpu_custom_call.1} parent=1 // pred_fallthru
      _
    // Predicated region
    $region30: #{tpu_custom_call.1} parent=1 // pred_check
      _
    $region31: #{tpu_custom_call.1} parent=1 // pred_check_branch
      %60 = sbr.rel (0) target = $region33
    $region32: #{tpu_custom_call.1} parent=1 // pred_region
      %61 = dma.done [#allocation6], 256
    $region33: #{tpu_custom_call.1} parent=1 // pred_fallthru
      _
    // Predicated region
    $region34: #{tpu_custom_call.1} parent=1 // pred_check
      _
    $region35: #{tpu_custom_call.1} parent=1 // pred_check_branch
      %63 = sbr.rel (0) target = $region37
    $region36: #{tpu_custom_call.1} parent=1 // pred_region
      %64 = dma.done [#allocation6], 512
    $region37: #{tpu_custom_call.1} parent=1 // pred_fallthru
      _
    %v65 = vld [vmem:[%s1] sm:$0x3]
    %v66 = vld [vmem:[#allocation2] sm:$0xff]
    %v67 = vld [vmem:[#allocation2 + $0x8] sm:$0xff]
    %v68 = vld [vmem:[%s5] sm:$0x1]
    %v69 = vld [vmem:[%s0] sm:$0x3]
    %v70 = vld [vmem:[#allocation7] sm:$0xff]
    %v71 = vld [vmem:[#allocation7 + $0x8] sm:$0xff]
    %v72 = vld [vmem:[#allocation7 + $0x10] sm:$0xff]
    %v73 = vld [vmem:[#allocation7 + $0x18] sm:$0xff]
    %vm74 = vcmask 261120
    %v76 = vsel %vm74, %v65, 0
    %78 = vmatprep.subr.mxu0 0.0
    %79 = vmatpush1.msra.mxu0 0.0
    %80 = vmatprep.subr.mxu0 0.0
    %81 = vmatpush1.msra.mxu0 0.0
    %82 = vmatprep.subr.mxu0 0.0
    %83 = vmatpush1.msra.mxu0 0.0
    %84 = vmatprep.subr.mxu0 0.0
    %85 = vmatpush1.msra.mxu0 0.0
    %86 = vmatprep.subr.mxu0 0.0
    %87 = vmatpush1.msra.mxu0 0.0
    %88 = vmatprep.subr.mxu0 0.0
    %89 = vmatpush1.msra.mxu0 0.0
    %90 = vmatprep.subr.mxu0 0.0
    %91 = vmatpush1.msra.mxu0 0.0
    %92 = vmatprep.subr.mxu0 0.0
    %93 = vmatpush1.msra.mxu0 0.0
    %94 = vmatprep.subr.mxu0 0.0
    %95 = vmatpush1.msra.mxu0 0.0
    %96 = vmatprep.subr.mxu0 0.0
    %97 = vmatpush1.msra.mxu0 0.0
    %98 = vmatprep.subr.mxu0 0.0
    %99 = vmatpush1.msra.mxu0 0.0
    %100 = vmatprep.subr.mxu0 0.0
    %101 = vmatpush1.msra.mxu0 0.0
    %102 = vmatprep.subr.mxu0 0.0
    %103 = vmatpush1.msra.mxu0 %v73
    %104 = vmatprep.subr.mxu0 0.0
    %105 = vmatpush1.msra.mxu0 %v72
    %106 = vmatprep.subr.mxu0 0.0
    %107 = vmatpush1.msra.mxu0 %v71
    %108 = vmatprep.subr.mxu0 0.0
    %109 = vmatpush1.msra.mxu0 %v70
    %110 = vmatprep.subr.mxu0 0.0
    %111 = vmatpush2.msra.mxu0 0.0
    %112 = vmatprep.subr.mxu0 0.0
    %113 = vmatpush2.msra.mxu0 0.0
    %114 = vmatprep.subr.mxu0 0.0
    %115 = vmatpush2.msra.mxu0 0.0
    %116 = vmatprep.subr.mxu0 0.0
    %117 = vmatpush2.msra.mxu0 0.0
    %118 = vmatprep.subr.mxu0 0.0
    %119 = vmatpush2.msra.mxu0 0.0
    %120 = vmatprep.subr.mxu0 0.0
    %121 = vmatpush2.msra.mxu0 0.0
    %122 = vmatprep.subr.mxu0 0.0
    %123 = vmatpush2.msra.mxu0 0.0
    %124 = vmatprep.subr.mxu0 0.0
    %125 = vmatpush2.msra.mxu0 0.0
    %126 = vmatprep.subr.mxu0 0.0
    %127 = vmatpush2.msra.mxu0 0.0
    %128 = vmatprep.subr.mxu0 0.0
    %129 = vmatpush2.msra.mxu0 0.0
    %130 = vmatprep.subr.mxu0 0.0
    %131 = vmatpush2.msra.mxu0 0.0
    %132 = vmatprep.subr.mxu0 0.0
    %133 = vmatpush2.msra.mxu0 0.0
    %134 = vmatprep.subr.mxu0 0.0
    %135 = vmatpush2.msra.mxu0 0.0
    %136 = vmatprep.subr.mxu0 0.0
    %137 = vmatpush2.msra.mxu0 0.0
    %138 = vmatprep.subr.mxu0 0.0
    %139 = vmatpush2.msra.mxu0 0.0
    %140 = vmatprep.subr.mxu0 0.0
    %141 = vmatpush2.msra.mxu0 0.0
    %142 = vmatprep.mubr.f32.mxu0 0.0
    %143 = vmatmul.mubr.f32.gmra.mxu0 %v76
    %v144 = vpop.f32.mrf.mxu0
    %v145 = vadd.f32 0.0, %v144
    %v146 = vpop.f32.mrf.mxu0
    %147 = vdwg.mxu0
    %v150 = vunpack.c.l.s4 1966171168
    %v151 = vunpack.c.0.s8 %v150
    %v152 = vlaneseq
    %v153 = vshrl.u32 %v152, 7
    %v154 = vsub.s32 %v151, %v153
    %v155 = vrot.slane %v145, %v154
    %v156 = vcombine.high %v155, %v155
    %v158 = vunpack.c.l.s4 1966171168
    %v159 = vunpack.c.0.s8 %v158
    %v160 = vlaneseq
    %v161 = vshrl.u32 %v160, 7
    %v162 = vsub.s32 %v159, %v161
    %v163 = vrot.slane %v155, %v162
    %v165 = vunpack.c.l.s4 1966171168
    %v166 = vunpack.c.0.s8 %v165
    %v167 = vlaneseq
    %v168 = vshrl.u32 %v167, 7
    %v169 = vsub.s32 %v166, %v168
    %v170 = vrot.slane %v156, %v169
    %v171 = vlaneseq
    %v172 = vshrl.u32 %v171, 7
    %v173 = vsub.s32 0, %v172
    %v174 = vrot.slane %v163, %v173
    %v175 = vlaneseq
    %v176 = vshrl.u32 %v175, 7
    %v177 = vsub.s32 0, %v176
    %v178 = vrot.slane %v170, %v177
    %v181 = vadd.f32 %v174, %v66
    %v182 = vadd.f32 %v178, %v67
    %v183 = vtanh.pop %v181
    %v184 = vtanh.pop %v182
    %v186 = vlaneseq
    %v187 = vshrl.u32 %v186, 7
    %v188 = vsub.s32 0, %v187
    %v189 = vrot.slane %v68, %v188
    %v191 = vmul.f32 %v183, %v189
    %v192 = vmul.f32 %v184, %v189
    %v193 = vsel %vm74, %v191, 0.0
    %194 = vadd.xlane.f32.xlu0 %v193
    %v195 = vpop.xlane.xlu0 %194
    %v196 = vsel %vm74, %v192, 0.0
    %197 = vadd.xlane.f32.xlu0 %v196
    %v198 = vpop.xlane.xlu0 %197
    %v199 = vlaneseq
    %v200 = vand.u32 %v199, 127
    %201 = vset.pattern.permute.xlu0 0
    %202 = vperm.xlu0 %201, %v69
    %v203 = vpop.permute.xlu0 %202
    %vm204 = vcmp.lt.s32.totalorder %v200, %v203
    %v207 = vlaneseq
    %v208 = vshrl.u32 %v207, 7
    %v209 = vsub.s32 %v200, %v208
    %v210 = vrot.slane %v195, %v209
    %v211 = vlaneseq
    %v212 = vshrl.u32 %v211, 7
    %v213 = vsub.s32 %v200, %v212
    %v214 = vrot.slane %v198, %v213
    %vm215 = vcmask 1041409
    %v216 = vsel %vm215, %v214, %v210
    %v218 = vsel %vm204, %v216, -inf
    %vm219 = vcmask 58368
    %v220 = vsel %vm219, %v218, -inf
    %221 = vmax.xlane.f32.xlu0 %v220
    %v222 = vpop.xlane.xlu0 %221
    %v223 = vsub.f32 %v218, %v222
    %v224 = vmul.f32 %v223, 1.442695
    %v225 = vpow.pop %v224
    %v226 = vsel %vm219, %v225, 0.0
    %227 = vadd.xlane.f32.xlu0 %v226
    %v228 = vpop.xlane.xlu0 %227
    %v229 = vrcp.pop %v228
    %v230 = vmul.f32 %v225, %v229
    %v231 = vlaneseq
    %v232 = vshrl.u32 %v231, 7
    %v233 = vsub.s32 0, %v232
    %v234 = vrot.slane %v230, %v233
    %236 = vbcast.lane.b32.xlu0 %v234, 256
    %v237 = vpop.permute.xlu0 %236
    %v238 = vlaneseq
    %v239 = vshrl.u32 %v238, 7
    %v240 = vsub.s32 1, %v239
    %v241 = vrot.slane %v230, %v240
    %243 = vbcast.lane.b32.xlu0 %v241, 256
    %v244 = vpop.permute.xlu0 %243
    %v245 = vld [vmem:[#allocation5] sm:$0xff]
    %v246 = vld [vmem:[#allocation5 + $0x8] sm:$0xff]
    %v247 = vmul.f32 %v237, %v245
    %v248 = vmul.f32 %v244, %v246
    %vm249 = vcmask 523264
    %v250 = vsel %vm249, %v247, 0.0
    %v251 = vrot.slane %v250, 4
    %v252 = vadd.f32 %v250, %v251
    %v253 = vrot.slane %v252, 2
    %v254 = vadd.f32 %v252, %v253
    %v255 = vrot.slane %v254, 1
    %v256 = vadd.f32 %v254, %v255
    %v257 = vsel %vm249, %v248, 0.0
    %v258 = vrot.slane %v257, 4
    %v259 = vadd.f32 %v257, %v258
    %v260 = vrot.slane %v259, 2
    %v261 = vadd.f32 %v259, %v260
    %v262 = vrot.slane %v261, 1
    %v263 = vadd.f32 %v261, %v262
    %v266 = vsel %vm215, %v263, %v256
    %269 = vrot.lane.b32.xlu0 %v230, 64
    %v270 = vpop.permute.xlu0 %269
    %v272 = vsel %vm249, %v266, %v270
    %vm273 = vcmask 588800
    %v274 = vsel %vm273, %v272, 0.0
    %275 = vst [vmem:[#allocation8] sm:$0x3] %v274
    // Predicated region
    $region38: #{tpu_custom_call.1} parent=1 // pred_check
      _
    $region39: #{tpu_custom_call.1} parent=1 // pred_check_branch
      %277 = sbr.rel (0) target = $region41
    $region40: #{tpu_custom_call.1} parent=1 // pred_region
      %s279 = ssub.s32 32, 32
      %280 = vsyncadd [#allocation4], %s279
      %s282 = sshll.u32 [#allocation8], 4
      %s283 = int_to_ptr.vmem [resolvable:$true] %s282
      %285 = dma.vmem_to_hbm [thread:$0]  %s283, 32, %s6, [#allocation4]
    $region41: #{tpu_custom_call.1} parent=1 // pred_fallthru
      _
    // Predicated region
    $region42: #{tpu_custom_call.1} parent=1 // pred_check
      _
    $region43: #{tpu_custom_call.1} parent=1 // pred_check_branch
      %287 = sbr.rel (0) target = $region45
    $region44: #{tpu_custom_call.1} parent=1 // pred_region
      %288 = dma.done [#allocation4], 32
    $region45: #{tpu_custom_call.1} parent=1 // pred_fallthru
      _
    %289 = vsyncpa [#allocation3], 1
    %290 = vsyncpa [#allocation6], 1
    %291 = vsyncpa [#allocation4], 1

</llo_original>
